<compile_context>
chip_gen: v6e
topology: v6e:2x2x1
jax: 0.10.0
libtpu: 0.0.40
codegen_flags: <defaults>
</compile_context>

<pallas_src>
import jax
import jax.numpy as jnp
from jax.experimental import pallas as pl
from jax.experimental.pallas import tpu as pltpu


def _fused_linear_kernel(x_ref, w_ref, o_ref):
    # x_ref: (batch, n_bands*feat_dim), w_ref: (n_bands*feat_dim, HD_dim)
    # Single MXU push; output last dim = HD_dim (multiple of 128 at the
    # reference sizes) -> full-lane vst, no masked partial stores.
    o_ref[...] = jnp.dot(
        x_ref[...], w_ref[...], preferred_element_type=jnp.float32
    ).astype(o_ref.dtype)


def _build_block_diag_weight(weights):
    """weights: (n_bands, subHD_dim, feat_dim) (PyTorch nn.Linear layout).

    Returns (n_bands*feat_dim, n_bands*subHD_dim) block-diagonal matrix with
    block (b, b) = weights[b].T and exact zeros elsewhere, so that
    x_flat @ w_bd == concat_b(x[:, b] @ weights[b].T).
    """
    n_bands, sub_hd, feat_dim = weights.shape
    wt = jnp.transpose(weights, (0, 2, 1))              # (n_bands, feat, sub)
    eye = jnp.eye(n_bands, dtype=weights.dtype)
    # [(b, f), (c, s)] = wt[b, f, s] * eye[b, c]  -> block-diagonal layout.
    w_bd = jnp.einsum("bfs,bc->bfcs", wt, eye)
    return w_bd.reshape(n_bands * feat_dim, n_bands * sub_hd)


@jax.jit
def net2_forward(x, weights):
    """x: (batch, n_bands, feat_dim) f32; weights: (n_bands, subHD_dim, feat_dim) f32.

    Returns (batch, HD_dim) with out[:, b*sub:(b+1)*sub] = x[:, b] @ weights[b].T
    """
    batch, n_bands, feat_dim = x.shape
    sub_hd = weights.shape[1]
    hd_dim = n_bands * sub_hd

    x_flat = x.reshape(batch, n_bands * feat_dim)        # contiguous, free
    w_bd = _build_block_diag_weight(weights)             # built once, outside kernel

    out = pl.pallas_call(
        _fused_linear_kernel,
        out_shape=jax.ShapeDtypeStruct((batch, hd_dim), x.dtype),
        # No grid: single invocation, full arrays resident in VMEM.
        in_specs=[
            pl.BlockSpec(memory_space=pltpu.MemorySpace.VMEM),
            pl.BlockSpec(memory_space=pltpu.MemorySpace.VMEM),
        ],
        out_specs=pl.BlockSpec(memory_space=pltpu.MemorySpace.VMEM),
    )(x_flat, w_bd)

    return out


if __name__ == "__main__":
    # Small shapes consistent with the module's forward:
    #   feat_dim=16, n_bands=4, HD_dim=128  ->  subHD_dim=32, batch=8
    batch, n_bands, feat_dim, hd_dim = 8, 4, 16, 128
    sub_hd = hd_dim // n_bands

    key = jax.random.PRNGKey(0)
    kx, kw = jax.random.split(key)
    x = jax.random.normal(kx, (batch, n_bands, feat_dim), dtype=jnp.float32)
    # Deterministic init of the n_bands Linear weights (shape matches
    # nn.Linear(feat_dim, subHD_dim).weight: (subHD_dim, feat_dim)).
    weights = (
        jax.random.normal(kw, (n_bands, sub_hd, feat_dim), dtype=jnp.float32)
        / jnp.sqrt(feat_dim)
    )
    # NOTE: self.enc_vec and self.sigm are defined in __init__ but unused in
    # forward, so they are intentionally not implemented.

    out = jax.block_until_ready(net2_forward(x, weights))

    # Pure-JAX reference check of the concatenated per-band linears.
    ref = jnp.einsum("bnf,nsf->bns", x, weights).reshape(batch, hd_dim)
    assert out.shape == (batch, hd_dim)
    assert jnp.allclose(out, ref, atol=1e-5, rtol=1e-5)

    print("KERNEL_OK")
</pallas_src>

<mosaic_0001>
module attributes {stable_mosaic.version = 11 : i64} {
  func.func @_fused_linear_kernel(%arg0: memref<8x64xf32, #tpu.memory_space<vmem>>, %arg1: memref<64x128xf32, #tpu.memory_space<vmem>>, %arg2: memref<8x128xf32, #tpu.memory_space<vmem>>) attributes {dimension_semantics = [], scalar_prefetch = 0 : i64, scratch_operands = 0 : i64, tpu.core_type = #tpu.core_type<tc>} {
    %c0 = arith.constant 0 : index
    %c0_0 = arith.constant 0 : index
    %0 = vector.load %arg0[%c0, %c0_0] : memref<8x64xf32, #tpu.memory_space<vmem>>, vector<8x64xf32>
    %c0_1 = arith.constant 0 : index
    %c0_2 = arith.constant 0 : index
    %1 = vector.load %arg1[%c0_1, %c0_2] : memref<64x128xf32, #tpu.memory_space<vmem>>, vector<64x128xf32>
    %cst = arith.constant dense<0.000000e+00> : vector<8x128xf32>
    %2 = tpu.matmul %0, %1, %cst {dimension_numbers = #tpu.dot_dimension_numbers<[1], [0], [0], [1], [0, 0, 1, 1], [], []>} : vector<8x64xf32>, vector<64x128xf32>, vector<8x128xf32> -> vector<8x128xf32>
    %c0_3 = arith.constant 0 : index
    %c0_4 = arith.constant 0 : index
    %3 = vector.load %arg2[%c0_3, %c0_4] : memref<8x128xf32, #tpu.memory_space<vmem>>, vector<8x128xf32>
    tpu.vector_store %arg2[%c0_3, %c0_4], %2 {strides = array<i32>} : memref<8x128xf32, #tpu.memory_space<vmem>>, vector<8x128xf32>,
    return
  }
}

</mosaic_0001>

<llo_original>
// kernel: net2_forward.1
$region0: #{net2_forward.1}
  #allocation0 [shape = 'u32[]', space=smem, size = 0x4, offset = 0x4, fixed_abs, tag = 'smem constant byte address 0x4 - core index']
  #allocation1 [shape = 'u32[144,128]{1,0:T(1,128)}', space=vmem, size = 0x12000, scoped, tag = 'internal scratch']
  %s0 = inlined_call_operand.vmem [shape: f32[8,64], index: 0, kind: input, shape index: {}]
  %s1 = inlined_call_operand.vmem [shape: f32[64,128], index: 1, kind: input, shape index: {}]
  %s2 = inlined_call_operand.hbm [shape: f32[8,128], index: 2, kind: output, shape index: {}]
  %s3 = sld [smem:[#allocation0]]
  $region18: #{net2_forward.1} parent=0
    _
  %s5 = ssub.s32 1, %s3
  %s6 = scalar_select 0, %s5, %s3
  $region1: #{net2_forward.1} parent=0
    #allocation2 [shape = 'u8[4096]{0}', space=vmem, size = 0x1000, scoped, tag = 'output window, operand 0, single buffered']
    #allocation3 [shape = 's32[1]{0}', space=sflag, size = 0x4, scoped, tag = 'scoped memory for net2_forward.1']
    %7 = vsyncpa [#allocation3], 0
    // Predicated region
    $region2: #{net2_forward.1} parent=1 // pred_check
      _
    $region3: #{net2_forward.1} parent=1 // pred_check_branch
      %9 = sbr.rel (0) target = $region5
    $region4: #{net2_forward.1} parent=1 // pred_region
      _
    $region5: #{net2_forward.1} parent=1 // pred_fallthru
      _
    // Predicated region
    $region6: #{net2_forward.1} parent=1 // pred_check
      _
    $region7: #{net2_forward.1} parent=1 // pred_check_branch
      %11 = sbr.rel (0) target = $region9
    $region8: #{net2_forward.1} parent=1 // pred_region
      _
    $region9: #{net2_forward.1} parent=1 // pred_fallthru
      _
    %v12 = vld [vmem:[%s0] sm:$0xff]
    %v13 = vld [vmem:[%s1] sm:$0xff]
    %v14 = vld [vmem:[%s1 + $0x8] sm:$0xff]
    %v15 = vld [vmem:[%s1 + $0x10] sm:$0xff]
    %v16 = vld [vmem:[%s1 + $0x18] sm:$0xff]
    %v17 = vld [vmem:[%s1 + $0x20] sm:$0xff]
    %v18 = vld [vmem:[%s1 + $0x28] sm:$0xff]
    %v19 = vld [vmem:[%s1 + $0x30] sm:$0xff]
    %v20 = vld [vmem:[%s1 + $0x38] sm:$0xff]
    %vm21 = vcmask 523264
    %v23 = vsel %vm21, %v12, 0
    %25 = vmatprep.subr.mxu0 0.0
    %26 = vmatpush1.msra.mxu0 0.0
    %27 = vmatprep.subr.mxu0 0.0
    %28 = vmatpush1.msra.mxu0 0.0
    %29 = vmatprep.subr.mxu0 0.0
    %30 = vmatpush1.msra.mxu0 0.0
    %31 = vmatprep.subr.mxu0 0.0
    %32 = vmatpush1.msra.mxu0 0.0
    %33 = vmatprep.subr.mxu0 0.0
    %34 = vmatpush1.msra.mxu0 0.0
    %35 = vmatprep.subr.mxu0 0.0
    %36 = vmatpush1.msra.mxu0 0.0
    %37 = vmatprep.subr.mxu0 0.0
    %38 = vmatpush1.msra.mxu0 0.0
    %39 = vmatprep.subr.mxu0 0.0
    %40 = vmatpush1.msra.mxu0 0.0
    %41 = vmatprep.subr.mxu0 0.0
    %42 = vmatpush1.msra.mxu0 %v20
    %43 = vmatprep.subr.mxu0 0.0
    %44 = vmatpush1.msra.mxu0 %v19
    %45 = vmatprep.subr.mxu0 0.0
    %46 = vmatpush1.msra.mxu0 %v18
    %47 = vmatprep.subr.mxu0 0.0
    %48 = vmatpush1.msra.mxu0 %v17
    %49 = vmatprep.subr.mxu0 0.0
    %50 = vmatpush1.msra.mxu0 %v16
    %51 = vmatprep.subr.mxu0 0.0
    %52 = vmatpush1.msra.mxu0 %v15
    %53 = vmatprep.subr.mxu0 0.0
    %54 = vmatpush1.msra.mxu0 %v14
    %55 = vmatprep.subr.mxu0 0.0
    %56 = vmatpush1.msra.mxu0 %v13
    %57 = vmatprep.subr.mxu0 0.0
    %58 = vmatpush2.msra.mxu0 0.0
    %59 = vmatprep.subr.mxu0 0.0
    %60 = vmatpush2.msra.mxu0 0.0
    %61 = vmatprep.subr.mxu0 0.0
    %62 = vmatpush2.msra.mxu0 0.0
    %63 = vmatprep.subr.mxu0 0.0
    %64 = vmatpush2.msra.mxu0 0.0
    %65 = vmatprep.subr.mxu0 0.0
    %66 = vmatpush2.msra.mxu0 0.0
    %67 = vmatprep.subr.mxu0 0.0
    %68 = vmatpush2.msra.mxu0 0.0
    %69 = vmatprep.subr.mxu0 0.0
    %70 = vmatpush2.msra.mxu0 0.0
    %71 = vmatprep.subr.mxu0 0.0
    %72 = vmatpush2.msra.mxu0 0.0
    %73 = vmatprep.subr.mxu0 0.0
    %74 = vmatpush2.msra.mxu0 0.0
    %75 = vmatprep.subr.mxu0 0.0
    %76 = vmatpush2.msra.mxu0 0.0
    %77 = vmatprep.subr.mxu0 0.0
    %78 = vmatpush2.msra.mxu0 0.0
    %79 = vmatprep.subr.mxu0 0.0
    %80 = vmatpush2.msra.mxu0 0.0
    %81 = vmatprep.subr.mxu0 0.0
    %82 = vmatpush2.msra.mxu0 0.0
    %83 = vmatprep.subr.mxu0 0.0
    %84 = vmatpush2.msra.mxu0 0.0
    %85 = vmatprep.subr.mxu0 0.0
    %86 = vmatpush2.msra.mxu0 0.0
    %87 = vmatprep.subr.mxu0 0.0
    %88 = vmatpush2.msra.mxu0 0.0
    %89 = vmatprep.mubr.f32.mxu0 0.0
    %90 = vmatmul.mubr.f32.gmra.mxu0 %v23
    %v91 = vpop.f32.mrf.mxu0
    %v92 = vadd.f32 0.0, %v91
    %v93 = vpop.f32.mrf.mxu0
    %94 = vdwg.mxu0
    %95 = vst [vmem:[#allocation2] sm:$0xff] %v92
    // Predicated region
    $region10: #{net2_forward.1} parent=1 // pred_check
      _
    $region11: #{net2_forward.1} parent=1 // pred_check_branch
      %97 = sbr.rel (0) target = $region13
    $region12: #{net2_forward.1} parent=1 // pred_region
      %s99 = ssub.s32 128, 128
      %100 = vsyncadd [#allocation3], %s99
      %s102 = sshll.u32 [#allocation2], 4
      %s103 = int_to_ptr.vmem [resolvable:$true] %s102
      %105 = dma.vmem_to_hbm [thread:$0]  %s103, 128, %s2, [#allocation3]
    $region13: #{net2_forward.1} parent=1 // pred_fallthru
      _
    // Predicated region
    $region14: #{net2_forward.1} parent=1 // pred_check
      _
    $region15: #{net2_forward.1} parent=1 // pred_check_branch
      %107 = sbr.rel (0) target = $region17
    $region16: #{net2_forward.1} parent=1 // pred_region
      %108 = dma.done [#allocation3], 128
    $region17: #{net2_forward.1} parent=1 // pred_fallthru
      _
    %109 = vsyncpa [#allocation3], 1

</llo_original>
